<compile_context>
chip_gen: v7x
topology: tpu7x:2x2x1
jax: 0.10.0
libtpu: 0.0.40
codegen_flags: <defaults>
</compile_context>

<pallas_src>
import functools
import math

import jax
import jax.numpy as jnp
from jax.experimental import pallas as pl
from jax.experimental.pallas import tpu as pltpu


# ---------------------------------------------------------------------------
# Fused Pallas kernel: the entire Linear stack in one pallas_call
# ---------------------------------------------------------------------------
def _fused_mlp_kernel(*refs, n_layers, out_dims, relu_after):
    """Fused MLP forward over one batch tile (batch in the lane dimension).

    refs layout:
      refs[0]                 : x_T tile          (in_dim, TB)        VMEM
      refs[1 : 1+n]           : W_i (torch layout) (d_{i+1}, d_i)     VMEM
      refs[1+n : 1+2n]        : b_i                (d_{i+1}, 1)       VMEM
      refs[1+2n]              : output slab        (sum(out_dims), TB) VMEM

    relu_after[i] is True when torch inserts nn.ReLU after Linear i
    (linear=False and 0 < i < n_layers-1).  The stored activation is the
    PRE-ReLU Linear output; only the value carried to the next layer gets the
    ReLU (free VPU op).
    """
    x_ref = refs[0]
    w_refs = refs[1:1 + n_layers]
    b_refs = refs[1 + n_layers:1 + 2 * n_layers]
    out_ref = refs[1 + 2 * n_layers]

    h = x_ref[...]                                   # (in_dim, TB)
    off = 0
    for i in range(n_layers):
        d = out_dims[i]
        # (d_out, d_in) @ (d_in, TB) -> (d_out, TB): MXU N-dim = TB (lane-dense).
        y = jnp.dot(w_refs[i][...], h, preferred_element_type=jnp.float32)
        y = y + b_refs[i][...]                       # (d_out, 1) broadcast over lanes
        out_ref[off:off + d, :] = y.astype(out_ref.dtype)
        h = jnp.maximum(y, 0.0) if relu_after[i] else y
        off += d


def _round_up(x, m):
    return ((x + m - 1) // m) * m


def _choose_batch_tile(B, batch_tile):
    """Lane-aligned batch tile with >=2 grid steps for batches >= 256 rows."""
    if B < 256:
        # Single full-array block (block == full dims is always legal).
        return B
    # >= 2 grid steps so v7x's second TensorCore gets work; multiple of 128 so
    # the lane dimension of every tile is unmasked; capped at batch_tile so
    # per-step pipeline overhead stays amortized on v5e/v6e.
    tb = min(batch_tile, _round_up(pl.cdiv(B, 2), 128))
    return max(tb, 128)


def fused_forward(x, weights, biases, relu_after, *, batch_tile=4096):
    """Run the whole Linear stack in one pallas_call, tiled over batch only.

    weights[i]: (d_{i+1}, d_i) f32  (PyTorch nn.Linear layout)
    biases[i] : (d_{i+1}, 1)   f32
    Returns the list [h1, ..., out] of pre-ReLU Linear outputs, each (B, d_{i+1}).
    """
    B, in_dim = x.shape
    n_layers = len(weights)
    out_dims = [w.shape[0] for w in weights]
    sum_out = sum(out_dims)

    TB = _choose_batch_tile(B, batch_tile)
    grid = (pl.cdiv(B, TB),)

    # One wrapper-side transpose puts the batch in the lane dimension; no pad,
    # no per-output slice-copy epilogue over padded arrays.
    x_t = x.T                                        # (in_dim, B)

    in_specs = [pl.BlockSpec((in_dim, TB), lambda i: (0, i))]
    in_specs += [pl.BlockSpec(w.shape, lambda i: (0, 0)) for w in weights]
    in_specs += [pl.BlockSpec(b.shape, lambda i: (0, 0)) for b in biases]

    out_specs = pl.BlockSpec((sum_out, TB), lambda i: (0, i))
    out_shape = jax.ShapeDtypeStruct((sum_out, B), jnp.float32)

    kernel = functools.partial(
        _fused_mlp_kernel,
        n_layers=n_layers,
        out_dims=tuple(out_dims),
        relu_after=tuple(relu_after),
    )
    slab_t = pl.pallas_call(
        kernel,
        out_shape=out_shape,
        grid=grid,
        in_specs=in_specs,
        out_specs=out_specs,
        compiler_params=pltpu.CompilerParams(
            dimension_semantics=("parallel",),
        ),
    )(x_t, *weights, *biases)

    # Transpose the (sum_out, B) slab once back to the (batch, features)
    # contract, then hand out cheap per-layer column slices.
    slab = slab_t.T                                  # (B, sum_out)
    outs = []
    off = 0
    for d in out_dims:
        outs.append(slab[:, off:off + d])
        off += d
    return outs


# ---------------------------------------------------------------------------
# FeatureModel in JAX (parameters built deterministically in-script)
# ---------------------------------------------------------------------------
class FeatureModelJAX:
    """JAX/Pallas port of FeatureModel's forward pass.

    Parameters are initialized like PyTorch's default nn.Linear init
    (uniform(-1/sqrt(fan_in), 1/sqrt(fan_in))) with a fixed PRNG key so the
    script is fully deterministic.
    """

    def __init__(self, layer_dims, linear=True, key=jax.random.PRNGKey(0)):
        self.layer_dims = list(layer_dims)
        self.linear = linear
        # num_features as defined by the layer_dims branch of the torch module.
        self.num_features = (
            sum(self.layer_dims) - self.layer_dims[0] - self.layer_dims[-1]
        )
        n_layers = len(self.layer_dims) - 1
        self.n_layers = n_layers
        keys = jax.random.split(key, 2 * n_layers)
        self.weights = []
        self.biases = []
        for i in range(n_layers):
            fan_in = self.layer_dims[i]
            fan_out = self.layer_dims[i + 1]
            bound = 1.0 / math.sqrt(fan_in)
            # PyTorch layout (out_dim, in_dim): used directly by the kernel.
            w = jax.random.uniform(
                keys[2 * i], (fan_out, fan_in), jnp.float32, -bound, bound
            )
            # Bias pre-shaped (out_dim, 1): broadcasts over the lane (batch) dim.
            b = jax.random.uniform(
                keys[2 * i + 1], (fan_out, 1), jnp.float32, -bound, bound
            )
            self.weights.append(w)
            self.biases.append(b)
        # torch inserts nn.ReLU after Linear i when (not linear) and
        # 0 < i < n_layers - 1.
        self.relu_after = tuple(
            (not linear) and (0 < i < n_layers - 1) for i in range(n_layers)
        )

    def forward(self, x):
        """Returns the list of activations [x, h1, ..., out], matching torch."""
        outs = fused_forward(x, self.weights, self.biases, self.relu_after)
        return [x] + outs

    def get_output(self, activations):
        return activations[-1]

    def get_dims(self):
        return self.layer_dims

    def get_feature_activations(self, activations):
        selected = []
        for a in activations[1:-1]:
            if a.ndim == 1:
                selected.append(a)
            else:
                selected.append(a[0])
        return jnp.concatenate(selected)

    # TODO(synk): get_seed() is an Adam optimization loop (training-time
    # utility), not part of the forward pass; not ported to Pallas.


# ---------------------------------------------------------------------------
# Reference (pure JAX) forward for a sanity check
# ---------------------------------------------------------------------------
def reference_forward(model, x):
    activations = [x]
    for i in range(model.n_layers):
        y = x @ model.weights[i].T + model.biases[i][:, 0]
        activations.append(y)
        x = jnp.maximum(y, 0.0) if model.relu_after[i] else y
    return activations


if __name__ == "__main__":
    # Small, deterministic configuration consistent with the module:
    # input_dim=32, two hidden feature layers (24, 16), output_dim=8.
    layer_dims = [32, 24, 16, 8]
    batch = 2
    x = jax.random.normal(jax.random.PRNGKey(1), (batch, layer_dims[0]), jnp.float32)

    for linear in (True, False):
        model = FeatureModelJAX(layer_dims, linear=linear, key=jax.random.PRNGKey(0))

        activations = model.forward(x)
        activations = [jax.block_until_ready(a) for a in activations]

        ref = reference_forward(model, x)
        for a, r in zip(activations, ref):
            assert a.shape == r.shape
            assert jnp.allclose(a, r, atol=1e-4, rtol=1e-4), "mismatch vs reference"

        out = model.get_output(activations)
        feats = model.get_feature_activations(activations)
        assert out.shape == (batch, layer_dims[-1])
        assert feats.shape == (model.num_features,)

    # Also exercise the multi-step "parallel" grid path with a ragged last
    # block (no wrapper pad/slice): 2056 rows -> TB=1152, grid=(2,), last
    # block is 904 rows wide in the lane dimension.
    big_batch = 2056
    xb = jax.random.normal(
        jax.random.PRNGKey(2), (big_batch, layer_dims[0]), jnp.float32
    )
    model = FeatureModelJAX(layer_dims, linear=False, key=jax.random.PRNGKey(0))
    acts_b = model.forward(xb)
    acts_b = [jax.block_until_ready(a) for a in acts_b]
    ref_b = reference_forward(model, xb)
    for a, r in zip(acts_b, ref_b):
        assert a.shape == r.shape
        assert jnp.allclose(a, r, atol=1e-4, rtol=1e-4), "mismatch vs reference (tiled)"

    print("KERNEL_OK")
</pallas_src>

<mosaic_0001>
module attributes {stable_mosaic.version = 11 : i64} {
  func.func @_fused_mlp_kernel(%arg0: i32, %arg1: memref<32x2xf32, #tpu.memory_space<vmem>>, %arg2: memref<24x32xf32, #tpu.memory_space<vmem>>, %arg3: memref<16x24xf32, #tpu.memory_space<vmem>>, %arg4: memref<8x16xf32, #tpu.memory_space<vmem>>, %arg5: memref<24x1xf32, #tpu.memory_space<vmem>>, %arg6: memref<16x1xf32, #tpu.memory_space<vmem>>, %arg7: memref<8x1xf32, #tpu.memory_space<vmem>>, %arg8: memref<48x2xf32, #tpu.memory_space<vmem>>) attributes {dimension_semantics = [#tpu.dimension_semantics<parallel>], iteration_bounds = array<i64: 1>, scalar_prefetch = 0 : i64, scratch_operands = 0 : i64, tpu.core_type = #tpu.core_type<tc>, window_params = [{transform_indices = @transform_0, window_bounds = array<i64: 32, 2>}, {pipeline_mode = #tpu.pipeline_mode<synchronous>, transform_indices = @transform_1, window_bounds = array<i64: 24, 32>}, {pipeline_mode = #tpu.pipeline_mode<synchronous>, transform_indices = @transform_2, window_bounds = array<i64: 16, 24>}, {pipeline_mode = #tpu.pipeline_mode<synchronous>, transform_indices = @transform_3, window_bounds = array<i64: 8, 16>}, {pipeline_mode = #tpu.pipeline_mode<synchronous>, transform_indices = @transform_4, window_bounds = array<i64: 24, 1>}, {pipeline_mode = #tpu.pipeline_mode<synchronous>, transform_indices = @transform_5, window_bounds = array<i64: 16, 1>}, {pipeline_mode = #tpu.pipeline_mode<synchronous>, transform_indices = @transform_6, window_bounds = array<i64: 8, 1>}, {transform_indices = @transform_7, window_bounds = array<i64: 48, 2>}]} {
    %c0 = arith.constant 0 : index
    %c0_0 = arith.constant 0 : index
    %0 = vector.load %arg1[%c0, %c0_0] : memref<32x2xf32, #tpu.memory_space<vmem>>, vector<32x2xf32>
    %c0_1 = arith.constant 0 : index
    %c0_2 = arith.constant 0 : index
    %1 = vector.load %arg2[%c0_1, %c0_2] : memref<24x32xf32, #tpu.memory_space<vmem>>, vector<24x32xf32>
    %cst = arith.constant dense<0.000000e+00> : vector<24x2xf32>
    %2 = tpu.matmul %1, %0, %cst {dimension_numbers = #tpu.dot_dimension_numbers<[1], [0], [0], [1], [0, 0, 1, 1], [], []>} : vector<24x32xf32>, vector<32x2xf32>, vector<24x2xf32> -> vector<24x2xf32>
    %c0_3 = arith.constant 0 : index
    %c0_4 = arith.constant 0 : index
    %3 = vector.load %arg5[%c0_3, %c0_4] : memref<24x1xf32, #tpu.memory_space<vmem>>, vector<24x1xf32>
    %4 = vector.broadcast %3 : vector<24x1xf32> to vector<24x2xf32>
    %5 = arith.addf %2, %4 : vector<24x2xf32>
    %c0_5 = arith.constant 0 : index
    %c0_6 = arith.constant 0 : index
    %6 = vector.load %arg8[%c0_5, %c0_6] : memref<48x2xf32, #tpu.memory_space<vmem>>, vector<24x2xf32>
    tpu.vector_store %arg8[%c0_5, %c0_6], %5 {strides = array<i32>} : memref<48x2xf32, #tpu.memory_space<vmem>>, vector<24x2xf32>,
    %c0_7 = arith.constant 0 : index
    %c0_8 = arith.constant 0 : index
    %7 = vector.load %arg3[%c0_7, %c0_8] : memref<16x24xf32, #tpu.memory_space<vmem>>, vector<16x24xf32>
    %cst_9 = arith.constant dense<0.000000e+00> : vector<16x2xf32>
    %8 = tpu.matmul %7, %5, %cst_9 {dimension_numbers = #tpu.dot_dimension_numbers<[1], [0], [0], [1], [0, 0, 1, 1], [], []>} : vector<16x24xf32>, vector<24x2xf32>, vector<16x2xf32> -> vector<16x2xf32>
    %c0_10 = arith.constant 0 : index
    %c0_11 = arith.constant 0 : index
    %9 = vector.load %arg6[%c0_10, %c0_11] : memref<16x1xf32, #tpu.memory_space<vmem>>, vector<16x1xf32>
    %10 = vector.broadcast %9 : vector<16x1xf32> to vector<16x2xf32>
    %11 = arith.addf %8, %10 : vector<16x2xf32>
    %c24 = arith.constant 24 : index
    %c0_12 = arith.constant 0 : index
    %12 = vector.load %arg8[%c24, %c0_12] : memref<48x2xf32, #tpu.memory_space<vmem>>, vector<16x2xf32>
    tpu.vector_store %arg8[%c24, %c0_12], %11 {strides = array<i32>} : memref<48x2xf32, #tpu.memory_space<vmem>>, vector<16x2xf32>,
    %c0_13 = arith.constant 0 : index
    %c0_14 = arith.constant 0 : index
    %13 = vector.load %arg4[%c0_13, %c0_14] : memref<8x16xf32, #tpu.memory_space<vmem>>, vector<8x16xf32>
    %cst_15 = arith.constant dense<0.000000e+00> : vector<8x2xf32>
    %14 = tpu.matmul %13, %11, %cst_15 {dimension_numbers = #tpu.dot_dimension_numbers<[1], [0], [0], [1], [0, 0, 1, 1], [], []>} : vector<8x16xf32>, vector<16x2xf32>, vector<8x2xf32> -> vector<8x2xf32>
    %c0_16 = arith.constant 0 : index
    %c0_17 = arith.constant 0 : index
    %15 = vector.load %arg7[%c0_16, %c0_17] : memref<8x1xf32, #tpu.memory_space<vmem>>, vector<8x1xf32>
    %16 = vector.broadcast %15 : vector<8x1xf32> to vector<8x2xf32>
    %17 = arith.addf %14, %16 : vector<8x2xf32>
    %c40 = arith.constant 40 : index
    %c0_18 = arith.constant 0 : index
    %18 = vector.load %arg8[%c40, %c0_18] : memref<48x2xf32, #tpu.memory_space<vmem>>, vector<8x2xf32>
    tpu.vector_store %arg8[%c40, %c0_18], %17 {strides = array<i32>} : memref<48x2xf32, #tpu.memory_space<vmem>>, vector<8x2xf32>,
    return
  }
  func.func @transform_0(%arg0: i32) -> (i32, i32) {
    %c0_i32 = arith.constant 0 : i32
    %c0_i32_0 = arith.constant 0 : i32
    return %c0_i32, %arg0 : i32, i32
  }
  func.func @transform_1(%arg0: i32) -> (i32, i32) {
    %c0_i32 = arith.constant 0 : i32
    %c0_i32_0 = arith.constant 0 : i32
    %c0_i32_1 = arith.constant 0 : i32
    return %c0_i32, %c0_i32_0 : i32, i32
  }
  func.func @transform_2(%arg0: i32) -> (i32, i32) {
    %c0_i32 = arith.constant 0 : i32
    %c0_i32_0 = arith.constant 0 : i32
    %c0_i32_1 = arith.constant 0 : i32
    return %c0_i32, %c0_i32_0 : i32, i32
  }
  func.func @transform_3(%arg0: i32) -> (i32, i32) {
    %c0_i32 = arith.constant 0 : i32
    %c0_i32_0 = arith.constant 0 : i32
    %c0_i32_1 = arith.constant 0 : i32
    return %c0_i32, %c0_i32_0 : i32, i32
  }
  func.func @transform_4(%arg0: i32) -> (i32, i32) {
    %c0_i32 = arith.constant 0 : i32
    %c0_i32_0 = arith.constant 0 : i32
    %c0_i32_1 = arith.constant 0 : i32
    return %c0_i32, %c0_i32_0 : i32, i32
  }
  func.func @transform_5(%arg0: i32) -> (i32, i32) {
    %c0_i32 = arith.constant 0 : i32
    %c0_i32_0 = arith.constant 0 : i32
    %c0_i32_1 = arith.constant 0 : i32
    return %c0_i32, %c0_i32_0 : i32, i32
  }
  func.func @transform_6(%arg0: i32) -> (i32, i32) {
    %c0_i32 = arith.constant 0 : i32
    %c0_i32_0 = arith.constant 0 : i32
    %c0_i32_1 = arith.constant 0 : i32
    return %c0_i32, %c0_i32_0 : i32, i32
  }
  func.func @transform_7(%arg0: i32) -> (i32, i32) {
    %c0_i32 = arith.constant 0 : i32
    %c0_i32_0 = arith.constant 0 : i32
    return %c0_i32, %arg0 : i32, i32
  }
}

</mosaic_0001>

<llo_original>
// kernel: tpu_custom_call.1
$region0: #{tpu_custom_call.1}
  #allocation0 [shape = 'u32[]', space=smem, size = 0x4, offset = 0x4, fixed_abs, tag = 'smem constant byte address 0x4 - core index']
  #allocation1 [shape = 'u32[144,128]{1,0:T(1,128)}', space=vmem, size = 0x12000, scoped, tag = 'internal scratch']
  %s0 = inlined_call_operand.vmem [shape: f32[32,2], index: 0, kind: input, shape index: {}]
  %s1 = inlined_call_operand.vmem [shape: f32[24,32], index: 1, kind: input, shape index: {}]
  %s2 = inlined_call_operand.vmem [shape: f32[16,24], index: 2, kind: input, shape index: {}]
  %s3 = inlined_call_operand.vmem [shape: f32[8,16], index: 3, kind: input, shape index: {}]
  %s4 = inlined_call_operand.vmem [shape: f32[24,1], index: 4, kind: input, shape index: {}]
  %s5 = inlined_call_operand.vmem [shape: f32[16,1], index: 5, kind: input, shape index: {}]
  %s6 = inlined_call_operand.vmem [shape: f32[8,1], index: 6, kind: input, shape index: {}]
  %s7 = inlined_call_operand.vmem [shape: f32[48,2], index: 7, kind: output, shape index: {}]
  %s8 = sld [smem:[#allocation0]]
  $region38: #{tpu_custom_call.1} parent=0
    _
  %s10 = ssub.s32 1, %s8
  %s11 = scalar_select 0, %s10, %s8
  // Predicated region
  $region2: #{tpu_custom_call.1} parent=0 // pred_check
    _
  $region3: #{tpu_custom_call.1} parent=0 // pred_check_branch
    %13 = sbr.rel (0) target = $region5
  $region4: #{tpu_custom_call.1} parent=0 // pred_region
    _
  $region5: #{tpu_custom_call.1} parent=0 // pred_fallthru
    _
  // Predicated region
  $region6: #{tpu_custom_call.1} parent=0 // pred_check
    _
  $region7: #{tpu_custom_call.1} parent=0 // pred_check_branch
    %15 = sbr.rel (0) target = $region9
  $region8: #{tpu_custom_call.1} parent=0 // pred_region
    _
  $region9: #{tpu_custom_call.1} parent=0 // pred_fallthru
    _
  // Predicated region
  $region10: #{tpu_custom_call.1} parent=0 // pred_check
    _
  $region11: #{tpu_custom_call.1} parent=0 // pred_check_branch
    %17 = sbr.rel (0) target = $region13
  $region12: #{tpu_custom_call.1} parent=0 // pred_region
    _
  $region13: #{tpu_custom_call.1} parent=0 // pred_fallthru
    _
  // Predicated region
  $region14: #{tpu_custom_call.1} parent=0 // pred_check
    _
  $region15: #{tpu_custom_call.1} parent=0 // pred_check_branch
    %19 = sbr.rel (0) target = $region17
  $region16: #{tpu_custom_call.1} parent=0 // pred_region
    _
  $region17: #{tpu_custom_call.1} parent=0 // pred_fallthru
    _
  // Predicated region
  $region18: #{tpu_custom_call.1} parent=0 // pred_check
    _
  $region19: #{tpu_custom_call.1} parent=0 // pred_check_branch
    %21 = sbr.rel (0) target = $region21
  $region20: #{tpu_custom_call.1} parent=0 // pred_region
    _
  $region21: #{tpu_custom_call.1} parent=0 // pred_fallthru
    _
  // Predicated region
  $region22: #{tpu_custom_call.1} parent=0 // pred_check
    _
  $region23: #{tpu_custom_call.1} parent=0 // pred_check_branch
    %23 = sbr.rel (0) target = $region25
  $region24: #{tpu_custom_call.1} parent=0 // pred_region
    _
  $region25: #{tpu_custom_call.1} parent=0 // pred_fallthru
    _
  // Predicated region
  $region26: #{tpu_custom_call.1} parent=0 // pred_check
    _
  $region27: #{tpu_custom_call.1} parent=0 // pred_check_branch
    %25 = sbr.rel (0) target = $region29
  $region28: #{tpu_custom_call.1} parent=0 // pred_region
    _
  $region29: #{tpu_custom_call.1} parent=0 // pred_fallthru
    _
  %v26 = vld [vmem:[%s0] sm:$0xff]
  %v27 = vld [vmem:[%s0 + $0x8] sm:$0xff]
  %v28 = vld [vmem:[%s0 + $0x10] sm:$0xff]
  %v29 = vld [vmem:[%s0 + $0x18] sm:$0xff]
  %v30 = vld [vmem:[%s1] sm:$0xff]
  %v31 = vld [vmem:[%s1 + $0x8] sm:$0xff]
  %v32 = vld [vmem:[%s1 + $0x10] sm:$0xff]
  %v33 = vld [vmem:[%s4] sm:$0xff]
  %v34 = vld [vmem:[%s4 + $0x8] sm:$0xff]
  %v35 = vld [vmem:[%s4 + $0x10] sm:$0xff]
  %37 = vset.pattern.permute.xlu0 0
  %38 = vperm.xlu0 %37, %v33
  %v39 = vpop.permute.xlu0 %38
  %42 = vset.pattern.permute.xlu0 0
  %43 = vperm.xlu0 %42, %v34
  %v44 = vpop.permute.xlu0 %43
  %47 = vset.pattern.permute.xlu0 0
  %48 = vperm.xlu0 %47, %v35
  %v49 = vpop.permute.xlu0 %48
  %vm51 = vcmask 261120
  %v53 = vsel %vm51, %v30, 0
  %v56 = vsel %vm51, %v31, 0
  %v59 = vsel %vm51, %v32, 0
  %61 = vmatprep.subr.mxu0 0.0
  %62 = vmatpush1.msra.mxu0 %v26
  %63 = vmatprep.subr.mxu0 0.0
  %64 = vmatpush1.msra.mxu0 %v27
  %65 = vmatprep.subr.mxu0 0.0
  %66 = vmatpush1.msra.mxu0 %v28
  %67 = vmatprep.subr.mxu0 0.0
  %68 = vmatpush1.msra.mxu0 %v29
  %69 = vmatprep.subr.mxu0 0.0
  %70 = vmatpush1.msra.mxu0 0.0
  %71 = vmatprep.subr.mxu0 0.0
  %72 = vmatpush1.msra.mxu0 0.0
  %73 = vmatprep.subr.mxu0 0.0
  %74 = vmatpush1.msra.mxu0 0.0
  %75 = vmatprep.subr.mxu0 0.0
  %76 = vmatpush1.msra.mxu0 0.0
  %77 = vmatprep.subr.mxu0 0.0
  %78 = vmatpush1.msra.mxu0 0.0
  %79 = vmatprep.subr.mxu0 0.0
  %80 = vmatpush1.msra.mxu0 0.0
  %81 = vmatprep.subr.mxu0 0.0
  %82 = vmatpush1.msra.mxu0 0.0
  %83 = vmatprep.subr.mxu0 0.0
  %84 = vmatpush1.msra.mxu0 0.0
  %85 = vmatprep.subr.mxu0 0.0
  %86 = vmatpush1.msra.mxu0 0.0
  %87 = vmatprep.subr.mxu0 0.0
  %88 = vmatpush1.msra.mxu0 0.0
  %89 = vmatprep.subr.mxu0 0.0
  %90 = vmatpush1.msra.mxu0 0.0
  %91 = vmatprep.subr.mxu0 0.0
  %92 = vmatpush1.msra.mxu0 0.0
  %93 = vmatprep.subr.mxu0 0.0
  %94 = vmatpush1.msra.mxu0 0.0
  %95 = vmatprep.subr.mxu0 0.0
  %96 = vmatpush1.msra.mxu0 0.0
  %97 = vmatprep.subr.mxu0 0.0
  %98 = vmatpush1.msra.mxu0 0.0
  %99 = vmatprep.subr.mxu0 0.0
  %100 = vmatpush1.msra.mxu0 0.0
  %101 = vmatprep.subr.mxu0 0.0
  %102 = vmatpush1.msra.mxu0 0.0
  %103 = vmatprep.subr.mxu0 0.0
  %104 = vmatpush1.msra.mxu0 0.0
  %105 = vmatprep.subr.mxu0 0.0
  %106 = vmatpush1.msra.mxu0 0.0
  %107 = vmatprep.subr.mxu0 0.0
  %108 = vmatpush1.msra.mxu0 0.0
  %109 = vmatprep.subr.mxu0 0.0
  %110 = vmatpush1.msra.mxu0 0.0
  %111 = vmatprep.subr.mxu0 0.0
  %112 = vmatpush1.msra.mxu0 0.0
  %113 = vmatprep.subr.mxu0 0.0
  %114 = vmatpush1.msra.mxu0 0.0
  %115 = vmatprep.subr.mxu0 0.0
  %116 = vmatpush1.msra.mxu0 0.0
  %117 = vmatprep.subr.mxu0 0.0
  %118 = vmatpush1.msra.mxu0 0.0
  %119 = vmatprep.subr.mxu0 0.0
  %120 = vmatpush1.msra.mxu0 0.0
  %121 = vmatprep.subr.mxu0 0.0
  %122 = vmatpush1.msra.mxu0 0.0
  %123 = vmatprep.subr.mxu0 0.0
  %124 = vmatpush1.msra.mxu0 0.0
  %125 = vmatprep.mubr.f32.mxu0 0.0
  %126 = vmatmul.mubr.f32.gmra.mrb[0].mxu0 %v53
  %v127 = vpop.f32.mrb[0].mxu0
  %v128 = vadd.f32 %v39, %v127
  %v129 = vpop.f32.mrb[0].mxu0
  %130 = vmatprep.mubr.f32.mxu0 0.0
  %131 = vmatmul.mubr.f32.gmra.mrb[0].mxu0 %v56
  %v132 = vpop.f32.mrb[0].mxu0
  %v133 = vadd.f32 %v44, %v132
  %v134 = vpop.f32.mrb[0].mxu0
  %135 = vmatprep.mubr.f32.mxu0 0.0
  %136 = vmatmul.mubr.f32.gmra.mrb[0].mxu0 %v59
  %v137 = vpop.f32.mrb[0].mxu0
  %v138 = vadd.f32 %v49, %v137
  %v139 = vpop.f32.mrb[0].mxu0
  %140 = vdwg.mxu0
  %vm141 = vcmask 15360
  %142 = vst.msk [vmem:[%s7] sm:$0xff] %vm141, %v128
  %143 = vst.msk [vmem:[%s7 + $0x8] sm:$0xff] %vm141, %v133
  %144 = vst.msk [vmem:[%s7 + $0x10] sm:$0xff] %vm141, %v138
  %v145 = vld [vmem:[%s2] sm:$0xff]
  %v146 = vld [vmem:[%s2 + $0x8] sm:$0xff]
  %v147 = vld [vmem:[%s5] sm:$0xff]
  %v148 = vld [vmem:[%s5 + $0x8] sm:$0xff]
  %150 = vset.pattern.permute.xlu0 0
  %151 = vperm.xlu0 %150, %v147
  %v152 = vpop.permute.xlu0 %151
  %155 = vset.pattern.permute.xlu0 0
  %156 = vperm.xlu0 %155, %v148
  %v157 = vpop.permute.xlu0 %156
  %vm159 = vcmask 195584
  %v161 = vsel %vm159, %v145, 0
  %v164 = vsel %vm159, %v146, 0
  %166 = vmatprep.subr.mxu0 0.0
  %167 = vmatpush1.msra.mxu0 %v128
  %168 = vmatprep.subr.mxu0 0.0
  %169 = vmatpush1.msra.mxu0 %v133
  %170 = vmatprep.subr.mxu0 0.0
  %171 = vmatpush1.msra.mxu0 %v138
  %172 = vmatprep.subr.mxu0 0.0
  %173 = vmatpush1.msra.mxu0 0.0
  %174 = vmatprep.subr.mxu0 0.0
  %175 = vmatpush1.msra.mxu0 0.0
  %176 = vmatprep.subr.mxu0 0.0
  %177 = vmatpush1.msra.mxu0 0.0
  %178 = vmatprep.subr.mxu0 0.0
  %179 = vmatpush1.msra.mxu0 0.0
  %180 = vmatprep.subr.mxu0 0.0
  %181 = vmatpush1.msra.mxu0 0.0
  %182 = vmatprep.subr.mxu0 0.0
  %183 = vmatpush1.msra.mxu0 0.0
  %184 = vmatprep.subr.mxu0 0.0
  %185 = vmatpush1.msra.mxu0 0.0
  %186 = vmatprep.subr.mxu0 0.0
  %187 = vmatpush1.msra.mxu0 0.0
  %188 = vmatprep.subr.mxu0 0.0
  %189 = vmatpush1.msra.mxu0 0.0
  %190 = vmatprep.subr.mxu0 0.0
  %191 = vmatpush1.msra.mxu0 0.0
  %192 = vmatprep.subr.mxu0 0.0
  %193 = vmatpush1.msra.mxu0 0.0
  %194 = vmatprep.subr.mxu0 0.0
  %195 = vmatpush1.msra.mxu0 0.0
  %196 = vmatprep.subr.mxu0 0.0
  %197 = vmatpush1.msra.mxu0 0.0
  %198 = vmatprep.subr.mxu0 0.0
  %199 = vmatpush1.msra.mxu0 0.0
  %200 = vmatprep.subr.mxu0 0.0
  %201 = vmatpush1.msra.mxu0 0.0
  %202 = vmatprep.subr.mxu0 0.0
  %203 = vmatpush1.msra.mxu0 0.0
  %204 = vmatprep.subr.mxu0 0.0
  %205 = vmatpush1.msra.mxu0 0.0
  %206 = vmatprep.subr.mxu0 0.0
  %207 = vmatpush1.msra.mxu0 0.0
  %208 = vmatprep.subr.mxu0 0.0
  %209 = vmatpush1.msra.mxu0 0.0
  %210 = vmatprep.subr.mxu0 0.0
  %211 = vmatpush1.msra.mxu0 0.0
  %212 = vmatprep.subr.mxu0 0.0
  %213 = vmatpush1.msra.mxu0 0.0
  %214 = vmatprep.subr.mxu0 0.0
  %215 = vmatpush1.msra.mxu0 0.0
  %216 = vmatprep.subr.mxu0 0.0
  %217 = vmatpush1.msra.mxu0 0.0
  %218 = vmatprep.subr.mxu0 0.0
  %219 = vmatpush1.msra.mxu0 0.0
  %220 = vmatprep.subr.mxu0 0.0
  %221 = vmatpush1.msra.mxu0 0.0
  %222 = vmatprep.subr.mxu0 0.0
  %223 = vmatpush1.msra.mxu0 0.0
  %224 = vmatprep.subr.mxu0 0.0
  %225 = vmatpush1.msra.mxu0 0.0
  %226 = vmatprep.subr.mxu0 0.0
  %227 = vmatpush1.msra.mxu0 0.0
  %228 = vmatprep.subr.mxu0 0.0
  %229 = vmatpush1.msra.mxu0 0.0
  %230 = vmatprep.mubr.f32.mxu0 0.0
  %231 = vmatmul.mubr.f32.gmra.mrb[0].mxu0 %v161
  %v232 = vpop.f32.mrb[0].mxu0
  %v233 = vadd.f32 %v152, %v232
  %v234 = vpop.f32.mrb[0].mxu0
  %235 = vmatprep.mubr.f32.mxu0 0.0
  %236 = vmatmul.mubr.f32.gmra.mrb[0].mxu0 %v164
  %v237 = vpop.f32.mrb[0].mxu0
  %v238 = vadd.f32 %v157, %v237
  %v239 = vpop.f32.mrb[0].mxu0
  %240 = vdwg.mxu0
  %241 = vst.msk [vmem:[%s7 + $0x18] sm:$0xff] %vm141, %v233
  %242 = vst.msk [vmem:[%s7 + $0x20] sm:$0xff] %vm141, %v238
  %v243 = vld [vmem:[%s3] sm:$0xff]
  %v244 = vld [vmem:[%s6] sm:$0xff]
  %246 = vset.pattern.permute.xlu0 0
  %247 = vperm.xlu0 %246, %v244
  %v248 = vpop.permute.xlu0 %247
  %vm250 = vcmask 130048
  %v252 = vsel %vm250, %v243, 0
  %254 = vmatprep.subr.mxu0 0.0
  %255 = vmatpush1.msra.mxu0 %v233
  %256 = vmatprep.subr.mxu0 0.0
  %257 = vmatpush1.msra.mxu0 %v238
  %258 = vmatprep.subr.mxu0 0.0
  %259 = vmatpush1.msra.mxu0 0.0
  %260 = vmatprep.subr.mxu0 0.0
  %261 = vmatpush1.msra.mxu0 0.0
  %262 = vmatprep.subr.mxu0 0.0
  %263 = vmatpush1.msra.mxu0 0.0
  %264 = vmatprep.subr.mxu0 0.0
  %265 = vmatpush1.msra.mxu0 0.0
  %266 = vmatprep.subr.mxu0 0.0
  %267 = vmatpush1.msra.mxu0 0.0
  %268 = vmatprep.subr.mxu0 0.0
  %269 = vmatpush1.msra.mxu0 0.0
  %270 = vmatprep.subr.mxu0 0.0
  %271 = vmatpush1.msra.mxu0 0.0
  %272 = vmatprep.subr.mxu0 0.0
  %273 = vmatpush1.msra.mxu0 0.0
  %274 = vmatprep.subr.mxu0 0.0
  %275 = vmatpush1.msra.mxu0 0.0
  %276 = vmatprep.subr.mxu0 0.0
  %277 = vmatpush1.msra.mxu0 0.0
  %278 = vmatprep.subr.mxu0 0.0
  %279 = vmatpush1.msra.mxu0 0.0
  %280 = vmatprep.subr.mxu0 0.0
  %281 = vmatpush1.msra.mxu0 0.0
  %282 = vmatprep.subr.mxu0 0.0
  %283 = vmatpush1.msra.mxu0 0.0
  %284 = vmatprep.subr.mxu0 0.0
  %285 = vmatpush1.msra.mxu0 0.0
  %286 = vmatprep.subr.mxu0 0.0
  %287 = vmatpush1.msra.mxu0 0.0
  %288 = vmatprep.subr.mxu0 0.0
  %289 = vmatpush1.msra.mxu0 0.0
  %290 = vmatprep.subr.mxu0 0.0
  %291 = vmatpush1.msra.mxu0 0.0
  %292 = vmatprep.subr.mxu0 0.0
  %293 = vmatpush1.msra.mxu0 0.0
  %294 = vmatprep.subr.mxu0 0.0
  %295 = vmatpush1.msra.mxu0 0.0
  %296 = vmatprep.subr.mxu0 0.0
  %297 = vmatpush1.msra.mxu0 0.0
  %298 = vmatprep.subr.mxu0 0.0
  %299 = vmatpush1.msra.mxu0 0.0
  %300 = vmatprep.subr.mxu0 0.0
  %301 = vmatpush1.msra.mxu0 0.0
  %302 = vmatprep.subr.mxu0 0.0
  %303 = vmatpush1.msra.mxu0 0.0
  %304 = vmatprep.subr.mxu0 0.0
  %305 = vmatpush1.msra.mxu0 0.0
  %306 = vmatprep.subr.mxu0 0.0
  %307 = vmatpush1.msra.mxu0 0.0
  %308 = vmatprep.subr.mxu0 0.0
  %309 = vmatpush1.msra.mxu0 0.0
  %310 = vmatprep.subr.mxu0 0.0
  %311 = vmatpush1.msra.mxu0 0.0
  %312 = vmatprep.subr.mxu0 0.0
  %313 = vmatpush1.msra.mxu0 0.0
  %314 = vmatprep.subr.mxu0 0.0
  %315 = vmatpush1.msra.mxu0 0.0
  %316 = vmatprep.subr.mxu0 0.0
  %317 = vmatpush1.msra.mxu0 0.0
  %318 = vmatprep.mubr.f32.mxu0 0.0
  %319 = vmatmul.mubr.f32.gmra.mrb[0].mxu0 %v252
  %v320 = vpop.f32.mrb[0].mxu0
  %v321 = vadd.f32 %v248, %v320
  %v322 = vpop.f32.mrb[0].mxu0
  %323 = vdwg.mxu0
  %324 = vst.msk [vmem:[%s7 + $0x28] sm:$0xff] %vm141, %v321
  // Predicated region
  $region30: #{tpu_custom_call.1} parent=0 // pred_check
    _
  $region31: #{tpu_custom_call.1} parent=0 // pred_check_branch
    %326 = sbr.rel (0) target = $region33
  $region32: #{tpu_custom_call.1} parent=0 // pred_region
    _
  $region33: #{tpu_custom_call.1} parent=0 // pred_fallthru
    _
  // Predicated region
  $region34: #{tpu_custom_call.1} parent=0 // pred_check
    _
  $region35: #{tpu_custom_call.1} parent=0 // pred_check_branch
    %328 = sbr.rel (0) target = $region37
  $region36: #{tpu_custom_call.1} parent=0 // pred_region
    _
  $region37: #{tpu_custom_call.1} parent=0 // pred_fallthru
    _

</llo_original>
